<compile_context>
chip_gen: v7x
topology: tpu7x:2x2x1
jax: 0.10.0
libtpu: 0.0.40
codegen_flags: <defaults>
</compile_context>

<pallas_src>
import functools

import jax
import jax.numpy as jnp
from jax import lax
from jax.experimental import pallas as pl
from jax.experimental.pallas import tpu as pltpu


def _swiglu_mlp_kernel(x_ref, w1_ref, w3_ref, w2_ref, o_ref, acc_ref):
    f = pl.program_id(1)

    @pl.when(f == 0)
    def _():
        acc_ref[...] = jnp.zeros_like(acc_ref)

    x = x_ref[...]                                    # [tt, H]
    # Contract the lane (last) dims of both operands: x @ W^T without ever
    # materializing a transposed weight in HBM.
    dn = (((1,), (1,)), ((), ()))

    h1 = lax.dot_general(x, w1_ref[...], dn,
                         preferred_element_type=jnp.float32)   # [tt, tf]
    h3 = lax.dot_general(x, w3_ref[...], dn,
                         preferred_element_type=jnp.float32)   # [tt, tf]
    h = (h1 * jax.nn.sigmoid(h1)) * h3                # SiLU(h1) * h3, f32

    # w2_ref is the native [H, tf] slice; h @ w2_slice^T accumulates [tt, H].
    acc_ref[...] += lax.dot_general(h.astype(w2_ref.dtype), w2_ref[...], dn,
                                    preferred_element_type=jnp.float32)

    @pl.when(f == pl.num_programs(1) - 1)
    def _():
        o_ref[...] = acc_ref[...].astype(o_ref.dtype)


@functools.partial(jax.jit, static_argnames=("tile_t", "tile_f"))
def mixtral_block_sparse_top2_mlp(x, w1, w2, w3, *, tile_t=256, tile_f=512):
    """SwiGLU MLP:  w2( SiLU(x @ w1^T) * (x @ w3^T) ).

    x       : [T, H]
    w1, w3  : [F, H]   (native PyTorch nn.Linear(hidden, ffn).weight layout)
    w2      : [H, F]   (native PyTorch nn.Linear(ffn, hidden).weight layout)
    """
    T, H = x.shape
    F_dim, H1 = w1.shape
    assert H1 == H and w3.shape == (F_dim, H) and w2.shape == (H, F_dim)

    tile_t = min(tile_t, T)
    tile_f = min(tile_f, F_dim)
    assert T % tile_t == 0, "token count must be divisible by tile_t"
    assert F_dim % tile_f == 0, "ffn_dim must be divisible by tile_f"

    grid = (T // tile_t, F_dim // tile_f)

    # --- VMEM budget: double-buffered weight tiles + x/out blocks + f32 acc ---
    w_item = jnp.dtype(w1.dtype).itemsize
    x_item = jnp.dtype(x.dtype).itemsize
    weight_bytes = 2 * 3 * tile_f * H * w_item          # 3 tiles, 2 pipeline bufs
    io_bytes = 2 * 2 * tile_t * H * x_item               # x + out, 2 bufs each
    acc_bytes = tile_t * H * 4                            # f32 accumulator
    vmem_limit = int(1.5 * (weight_bytes + io_bytes + acc_bytes)) + (4 << 20)
    vmem_limit = max(32 << 20, min(vmem_limit, 100 << 20))

    cost = pl.CostEstimate(
        flops=6 * T * H * F_dim,                          # three T*H*F matmuls
        transcendentals=T * F_dim,                        # sigmoid in SiLU
        bytes_accessed=3 * F_dim * H * w_item + 2 * T * H * x_item,
    )

    return pl.pallas_call(
        _swiglu_mlp_kernel,
        out_shape=jax.ShapeDtypeStruct((T, H), x.dtype),
        grid_spec=pltpu.PrefetchScalarGridSpec(
            num_scalar_prefetch=0,
            grid=grid,
            in_specs=[
                pl.BlockSpec((tile_t, H), lambda t, f: (t, 0)),   # x tile
                pl.BlockSpec((tile_f, H), lambda t, f: (f, 0)),   # w1 tile [F,H]
                pl.BlockSpec((tile_f, H), lambda t, f: (f, 0)),   # w3 tile [F,H]
                pl.BlockSpec((H, tile_f), lambda t, f: (0, f)),   # w2 tile [H,F]
            ],
            out_specs=pl.BlockSpec((tile_t, H), lambda t, f: (t, 0)),
            scratch_shapes=[pltpu.VMEM((tile_t, H), jnp.float32)],
        ),
        compiler_params=pltpu.CompilerParams(
            dimension_semantics=("parallel", "arbitrary"),
            vmem_limit_bytes=vmem_limit,
        ),
        cost_estimate=cost,
    )(x, w1, w3, w2)


def _reference(x, w1, w2, w3):
    h1 = x @ w1.T
    h1 = h1 * jax.nn.sigmoid(h1)        # SiLU
    h3 = x @ w3.T
    return (h1 * h3) @ w2.T


if __name__ == "__main__":
    # Small, TPU-friendly shapes consistent with the module:
    # tokens=8, hidden_size=128, intermediate_size=256.
    T, H, F_dim = 8, 128, 256
    key = jax.random.PRNGKey(0)
    kx, k1, k2, k3 = jax.random.split(key, 4)

    x = jax.random.normal(kx, (T, H), dtype=jnp.float32)
    # nn.Linear(hidden, ffn).weight -> [ffn, hidden]; initializer_range=0.02
    w1 = 0.02 * jax.random.normal(k1, (F_dim, H), dtype=jnp.float32)
    w3 = 0.02 * jax.random.normal(k3, (F_dim, H), dtype=jnp.float32)
    # nn.Linear(ffn, hidden).weight -> [hidden, ffn]
    w2 = 0.02 * jax.random.normal(k2, (H, F_dim), dtype=jnp.float32)

    out = mixtral_block_sparse_top2_mlp(x, w1, w2, w3)
    out = jax.block_until_ready(out)

    ref = _reference(x, w1, w2, w3)
    assert out.shape == (T, H) and out.dtype == x.dtype
    assert jnp.allclose(out, ref, atol=1e-4, rtol=1e-4), "mismatch vs reference"

    print("KERNEL_OK")
</pallas_src>

<mosaic_0001>
module attributes {stable_mosaic.version = 11 : i64} {
  func.func @_swiglu_mlp_kernel(%arg0: i32, %arg1: i32, %arg2: memref<8x128xf32, #tpu.memory_space<vmem>>, %arg3: memref<256x128xf32, #tpu.memory_space<vmem>>, %arg4: memref<256x128xf32, #tpu.memory_space<vmem>>, %arg5: memref<128x256xf32, #tpu.memory_space<vmem>>, %arg6: memref<8x128xf32, #tpu.memory_space<vmem>>, %arg7: memref<8x128xf32, #tpu.memory_space<vmem>>) attributes {dimension_semantics = [#tpu.dimension_semantics<parallel>, #tpu.dimension_semantics<arbitrary>], iteration_bounds = array<i64: 1, 1>, scalar_prefetch = 0 : i64, scratch_operands = 1 : i64, tpu.core_type = #tpu.core_type<tc>, window_params = [{transform_indices = @transform_0, window_bounds = array<i64: 8, 128>}, {transform_indices = @transform_1, window_bounds = array<i64: 256, 128>}, {transform_indices = @transform_2, window_bounds = array<i64: 256, 128>}, {transform_indices = @transform_3, window_bounds = array<i64: 128, 256>}, {transform_indices = @transform_4, window_bounds = array<i64: 8, 128>}]} {
    %c0_i32 = arith.constant 0 : i32
    %0 = arith.cmpi eq, %arg1, %c0_i32 : i32
    %1 = arith.extui %0 : i1 to i32
    %c0_i32_0 = arith.constant 0 : i32
    %2 = arith.cmpi ne, %1, %c0_i32_0 : i32
    scf.if %2 {
      %cst_17 = arith.constant 0.000000e+00 : f32
      %23 = vector.broadcast %cst_17 : f32 to vector<8x128xf32>
      %c0_18 = arith.constant 0 : index
      %c0_19 = arith.constant 0 : index
      %24 = vector.load %arg7[%c0_18, %c0_19] : memref<8x128xf32, #tpu.memory_space<vmem>>, vector<8x128xf32>
      tpu.vector_store %arg7[%c0_18, %c0_19], %23 {strides = array<i32>} : memref<8x128xf32, #tpu.memory_space<vmem>>, vector<8x128xf32>,
    } else {
    }
    %c0 = arith.constant 0 : index
    %c0_1 = arith.constant 0 : index
    %3 = vector.load %arg2[%c0, %c0_1] : memref<8x128xf32, #tpu.memory_space<vmem>>, vector<8x128xf32>
    %c0_2 = arith.constant 0 : index
    %c0_3 = arith.constant 0 : index
    %4 = vector.load %arg3[%c0_2, %c0_3] : memref<256x128xf32, #tpu.memory_space<vmem>>, vector<256x128xf32>
    %cst = arith.constant dense<0.000000e+00> : vector<8x256xf32>
    %5 = tpu.matmul %3, %4, %cst {dimension_numbers = #tpu.dot_dimension_numbers<[1], [1], [0], [0], [0, 0, 1, 0], [], []>} : vector<8x128xf32>, vector<256x128xf32>, vector<8x256xf32> -> vector<8x256xf32>
    %c0_4 = arith.constant 0 : index
    %c0_5 = arith.constant 0 : index
    %6 = vector.load %arg4[%c0_4, %c0_5] : memref<256x128xf32, #tpu.memory_space<vmem>>, vector<256x128xf32>
    %cst_6 = arith.constant dense<0.000000e+00> : vector<8x256xf32>
    %7 = tpu.matmul %3, %6, %cst_6 {dimension_numbers = #tpu.dot_dimension_numbers<[1], [1], [0], [0], [0, 0, 1, 0], [], []>} : vector<8x128xf32>, vector<256x128xf32>, vector<8x256xf32> -> vector<8x256xf32>
    %8 = arith.negf %5 : vector<8x256xf32>
    %9 = math.exp %8 : vector<8x256xf32>
    %cst_7 = arith.constant 1.000000e+00 : f32
    %10 = vector.broadcast %cst_7 : f32 to vector<8x256xf32>
    %11 = arith.addf %10, %9 : vector<8x256xf32>
    %12 = arith.divf %10, %11 : vector<8x256xf32>
    %13 = arith.mulf %5, %12 : vector<8x256xf32>
    %14 = arith.mulf %13, %7 : vector<8x256xf32>
    %c0_8 = arith.constant 0 : index
    %c0_9 = arith.constant 0 : index
    %15 = vector.load %arg7[%c0_8, %c0_9] : memref<8x128xf32, #tpu.memory_space<vmem>>, vector<8x128xf32>
    %c0_10 = arith.constant 0 : index
    %c0_11 = arith.constant 0 : index
    %16 = vector.load %arg5[%c0_10, %c0_11] : memref<128x256xf32, #tpu.memory_space<vmem>>, vector<128x256xf32>
    %cst_12 = arith.constant dense<0.000000e+00> : vector<8x128xf32>
    %17 = tpu.matmul %14, %16, %cst_12 {dimension_numbers = #tpu.dot_dimension_numbers<[1], [1], [0], [0], [0, 0, 1, 0], [], []>} : vector<8x256xf32>, vector<128x256xf32>, vector<8x128xf32> -> vector<8x128xf32>
    %18 = arith.addf %15, %17 : vector<8x128xf32>
    %c0_13 = arith.constant 0 : index
    %c0_14 = arith.constant 0 : index
    %19 = vector.load %arg7[%c0_13, %c0_14] : memref<8x128xf32, #tpu.memory_space<vmem>>, vector<8x128xf32>
    tpu.vector_store %arg7[%c0_13, %c0_14], %18 {strides = array<i32>} : memref<8x128xf32, #tpu.memory_space<vmem>>, vector<8x128xf32>,
    %c0_i32_15 = arith.constant 0 : i32
    %20 = arith.cmpi eq, %arg1, %c0_i32_15 : i32
    %21 = arith.extui %20 : i1 to i32
    %c0_i32_16 = arith.constant 0 : i32
    %22 = arith.cmpi ne, %21, %c0_i32_16 : i32
    scf.if %22 {
      %c0_17 = arith.constant 0 : index
      %c0_18 = arith.constant 0 : index
      %23 = vector.load %arg7[%c0_17, %c0_18] : memref<8x128xf32, #tpu.memory_space<vmem>>, vector<8x128xf32>
      %c0_19 = arith.constant 0 : index
      %c0_20 = arith.constant 0 : index
      %24 = vector.load %arg6[%c0_19, %c0_20] : memref<8x128xf32, #tpu.memory_space<vmem>>, vector<8x128xf32>
      tpu.vector_store %arg6[%c0_19, %c0_20], %23 {strides = array<i32>} : memref<8x128xf32, #tpu.memory_space<vmem>>, vector<8x128xf32>,
    } else {
    }
    return
  }
  func.func @transform_0(%arg0: i32, %arg1: i32) -> (i32, i32) {
    %c0_i32 = arith.constant 0 : i32
    %c0_i32_0 = arith.constant 0 : i32
    return %arg0, %c0_i32 : i32, i32
  }
  func.func @transform_1(%arg0: i32, %arg1: i32) -> (i32, i32) {
    %c0_i32 = arith.constant 0 : i32
    %c0_i32_0 = arith.constant 0 : i32
    return %arg1, %c0_i32 : i32, i32
  }
  func.func @transform_2(%arg0: i32, %arg1: i32) -> (i32, i32) {
    %c0_i32 = arith.constant 0 : i32
    %c0_i32_0 = arith.constant 0 : i32
    return %arg1, %c0_i32 : i32, i32
  }
  func.func @transform_3(%arg0: i32, %arg1: i32) -> (i32, i32) {
    %c0_i32 = arith.constant 0 : i32
    %c0_i32_0 = arith.constant 0 : i32
    return %c0_i32, %arg1 : i32, i32
  }
  func.func @transform_4(%arg0: i32, %arg1: i32) -> (i32, i32) {
    %c0_i32 = arith.constant 0 : i32
    %c0_i32_0 = arith.constant 0 : i32
    return %arg0, %c0_i32 : i32, i32
  }
}

</mosaic_0001>

<llo_original>
// kernel: mixtral_block_sparse_top2_mlp.1
$region0: #{mixtral_block_sparse_top2_mlp.1}
  #allocation0 [shape = 'u32[]', space=smem, size = 0x4, offset = 0x4, fixed_abs, tag = 'smem constant byte address 0x4 - core index']
  #allocation1 [shape = 'u32[144,128]{1,0:T(1,128)}', space=vmem, size = 0x12000, scoped, tag = 'internal scratch']
  #allocation2 [shape = 'f32[8,128]{1,0:T(8,128)}', space=vmem, size = 0x1000, scoped, tag = 'scratch operand']
  %s0 = inlined_call_operand.hbm [shape: f32[8,128], index: 0, kind: input, shape index: {}]
  %s1 = inlined_call_operand.hbm [shape: f32[256,128], index: 1, kind: input, shape index: {}]
  %s2 = inlined_call_operand.hbm [shape: f32[256,128], index: 2, kind: input, shape index: {}]
  %s3 = inlined_call_operand.hbm [shape: f32[128,256], index: 3, kind: input, shape index: {}]
  %s4 = inlined_call_operand.hbm [shape: f32[8,128], index: 4, kind: output, shape index: {}]
  %s5 = sld [smem:[#allocation0]]
  $region50: #{mixtral_block_sparse_top2_mlp.1} parent=0
    _
  %s7 = ssub.s32 1, %s5
  %s8 = scalar_select 0, %s7, %s5
  $region1: #{mixtral_block_sparse_top2_mlp.1} parent=0
    #allocation3 [shape = 'u8[4096]{0}', space=vmem, size = 0x1000, scoped, tag = 'input window, operand 0, single buffered']
    #allocation4 [shape = 's32[1]{0}', space=sflag, size = 0x4, scoped, tag = 'scoped memory for mixtral_block_sparse_top2_mlp.1']
    #allocation5 [shape = 's32[1]{0}', space=sflag, size = 0x4, scoped, tag = 'scoped memory for mixtral_block_sparse_top2_mlp.1']
    #allocation6 [shape = 'u8[131072]{0}', space=vmem, size = 0x20000, scoped, tag = 'input window, operand 1, single buffered']
    #allocation7 [shape = 's32[1]{0}', space=sflag, size = 0x4, scoped, tag = 'scoped memory for mixtral_block_sparse_top2_mlp.1']
    #allocation8 [shape = 'u8[131072]{0}', space=vmem, size = 0x20000, scoped, tag = 'input window, operand 2, single buffered']
    #allocation9 [shape = 'u8[131072]{0}', space=vmem, size = 0x20000, scoped, tag = 'input window, operand 3, single buffered']
    #allocation10 [shape = 's32[1]{0}', space=sflag, size = 0x4, scoped, tag = 'scoped memory for mixtral_block_sparse_top2_mlp.1']
    #allocation11 [shape = 'u8[4096]{0}', space=vmem, size = 0x1000, scoped, tag = 'output window, operand 0, single buffered']
    %9 = vsyncpa [#allocation4], 0
    %10 = vsyncpa [#allocation7], 0
    %11 = vsyncpa [#allocation10], 0
    %12 = vsyncpa [#allocation5], 0
    // Predicated region
    $region2: #{mixtral_block_sparse_top2_mlp.1} parent=1 // pred_check
      _
    $region3: #{mixtral_block_sparse_top2_mlp.1} parent=1 // pred_check_branch
      %14 = sbr.rel (0) target = $region5
    $region4: #{mixtral_block_sparse_top2_mlp.1} parent=1 // pred_region
      %s16 = ssub.s32 128, 128
      %17 = vsyncadd [#allocation4], %s16
      %s19 = sshll.u32 [#allocation3], 4
      %s20 = int_to_ptr.vmem [resolvable:$true] %s19
      %22 = dma.hbm_to_vmem [thread:$0]  %s0, 128, %s20, [#allocation4]
    $region5: #{mixtral_block_sparse_top2_mlp.1} parent=1 // pred_fallthru
      _
    // Predicated region
    $region6: #{mixtral_block_sparse_top2_mlp.1} parent=1 // pred_check
      _
    $region7: #{mixtral_block_sparse_top2_mlp.1} parent=1 // pred_check_branch
      %24 = sbr.rel (0) target = $region9
    $region8: #{mixtral_block_sparse_top2_mlp.1} parent=1 // pred_region
      %s26 = ssub.s32 4096, 4096
      %27 = vsyncadd [#allocation7], %s26
      %s28 = sshll.u32 [#allocation6], 4
      %s29 = int_to_ptr.vmem [resolvable:$true] %s28
      %34 = dma.hbm_to_vmem [thread:$0]  %s1, 4096, %s29, [#allocation7], 128, 128, 8
    $region9: #{mixtral_block_sparse_top2_mlp.1} parent=1 // pred_fallthru
      _
    // Predicated region
    $region10: #{mixtral_block_sparse_top2_mlp.1} parent=1 // pred_check
      _
    $region11: #{mixtral_block_sparse_top2_mlp.1} parent=1 // pred_check_branch
      %36 = sbr.rel (0) target = $region13
    $region12: #{mixtral_block_sparse_top2_mlp.1} parent=1 // pred_region
      %s38 = ssub.s32 4096, 4096
      %39 = vsyncadd [#allocation7], %s38
      %s40 = sshll.u32 [#allocation8], 4
      %s41 = int_to_ptr.vmem [resolvable:$true] %s40
      %46 = dma.hbm_to_vmem [thread:$0]  %s2, 4096, %s41, [#allocation7], 128, 128, 8
    $region13: #{mixtral_block_sparse_top2_mlp.1} parent=1 // pred_fallthru
      _
    // Predicated region
    $region14: #{mixtral_block_sparse_top2_mlp.1} parent=1 // pred_check
      _
    $region15: #{mixtral_block_sparse_top2_mlp.1} parent=1 // pred_check_branch
      %48 = sbr.rel (0) target = $region17
    $region16: #{mixtral_block_sparse_top2_mlp.1} parent=1 // pred_region
      %s50 = ssub.s32 4096, 4096
      %51 = vsyncadd [#allocation10], %s50
      %s52 = sshll.u32 [#allocation9], 4
      %s53 = int_to_ptr.vmem [resolvable:$true] %s52
      %58 = dma.hbm_to_vmem [thread:$0]  %s3, 4096, %s53, [#allocation10], 256, 256, 16
    $region17: #{mixtral_block_sparse_top2_mlp.1} parent=1 // pred_fallthru
      _
    // Predicated region
    $region18: #{mixtral_block_sparse_top2_mlp.1} parent=1 // pred_check
      _
    $region19: #{mixtral_block_sparse_top2_mlp.1} parent=1 // pred_check_branch
      %60 = sbr.rel (0) target = $region21
    $region20: #{mixtral_block_sparse_top2_mlp.1} parent=1 // pred_region
      %61 = dma.done [#allocation4], 128
    $region21: #{mixtral_block_sparse_top2_mlp.1} parent=1 // pred_fallthru
      _
    // Predicated region
    $region22: #{mixtral_block_sparse_top2_mlp.1} parent=1 // pred_check
      _
    $region23: #{mixtral_block_sparse_top2_mlp.1} parent=1 // pred_check_branch
      %63 = sbr.rel (0) target = $region25
    $region24: #{mixtral_block_sparse_top2_mlp.1} parent=1 // pred_region
      %64 = dma.done [#allocation7], 4096
    $region25: #{mixtral_block_sparse_top2_mlp.1} parent=1 // pred_fallthru
      _
    // Predicated region
    $region26: #{mixtral_block_sparse_top2_mlp.1} parent=1 // pred_check
      _
    $region27: #{mixtral_block_sparse_top2_mlp.1} parent=1 // pred_check_branch
      %66 = sbr.rel (0) target = $region29
    $region28: #{mixtral_block_sparse_top2_mlp.1} parent=1 // pred_region
      %67 = dma.done [#allocation7], 4096
    $region29: #{mixtral_block_sparse_top2_mlp.1} parent=1 // pred_fallthru
      _
    // Predicated region
    $region30: #{mixtral_block_sparse_top2_mlp.1} parent=1 // pred_check
      _
    $region31: #{mixtral_block_sparse_top2_mlp.1} parent=1 // pred_check_branch
      %69 = sbr.rel (0) target = $region33
    $region32: #{mixtral_block_sparse_top2_mlp.1} parent=1 // pred_region
      %70 = dma.done [#allocation10], 4096
    $region33: #{mixtral_block_sparse_top2_mlp.1} parent=1 // pred_fallthru
      _
    %p71 = scmp.eq.s32.totalorder 0, 0
    // Predicated region
    $region34: #{mixtral_block_sparse_top2_mlp.1} parent=1 // pred_check
      %p72 = pneg %p71
    $region35: #{mixtral_block_sparse_top2_mlp.1} parent=1 // pred_check_branch
      %74 = sbr.rel (%p72) target = $region37
    $region36: #{mixtral_block_sparse_top2_mlp.1} parent=1 // pred_region
      %75 = vst [vmem:[#allocation2] sm:$0xff] 0.0
    $region37: #{mixtral_block_sparse_top2_mlp.1} parent=1 // pred_fallthru
      _
    %v76 = vld [vmem:[#allocation3] sm:$0xff]
    %v77 = vld [vmem:[#allocation6] sm:$0xff]
    %v78 = vld [vmem:[#allocation6 + $0x8] sm:$0xff]
    %v79 = vld [vmem:[#allocation6 + $0x10] sm:$0xff]
    %v80 = vld [vmem:[#allocation6 + $0x18] sm:$0xff]
    %v81 = vld [vmem:[#allocation6 + $0x20] sm:$0xff]
    %v82 = vld [vmem:[#allocation6 + $0x28] sm:$0xff]
    %v83 = vld [vmem:[#allocation6 + $0x30] sm:$0xff]
    %v84 = vld [vmem:[#allocation6 + $0x38] sm:$0xff]
    %v85 = vld [vmem:[#allocation6 + $0x40] sm:$0xff]
    %v86 = vld [vmem:[#allocation6 + $0x48] sm:$0xff]
    %v87 = vld [vmem:[#allocation6 + $0x50] sm:$0xff]
    %v88 = vld [vmem:[#allocation6 + $0x58] sm:$0xff]
    %v89 = vld [vmem:[#allocation6 + $0x60] sm:$0xff]
    %v90 = vld [vmem:[#allocation6 + $0x68] sm:$0xff]
    %v91 = vld [vmem:[#allocation6 + $0x70] sm:$0xff]
    %v92 = vld [vmem:[#allocation6 + $0x78] sm:$0xff]
    %v93 = vld [vmem:[#allocation6 + $0x80] sm:$0xff]
    %v94 = vld [vmem:[#allocation6 + $0x88] sm:$0xff]
    %v95 = vld [vmem:[#allocation6 + $0x90] sm:$0xff]
    %v96 = vld [vmem:[#allocation6 + $0x98] sm:$0xff]
    %v97 = vld [vmem:[#allocation6 + $0xa0] sm:$0xff]
    %v98 = vld [vmem:[#allocation6 + $0xa8] sm:$0xff]
    %v99 = vld [vmem:[#allocation6 + $0xb0] sm:$0xff]
    %v100 = vld [vmem:[#allocation6 + $0xb8] sm:$0xff]
    %v101 = vld [vmem:[#allocation6 + $0xc0] sm:$0xff]
    %v102 = vld [vmem:[#allocation6 + $0xc8] sm:$0xff]
    %v103 = vld [vmem:[#allocation6 + $0xd0] sm:$0xff]
    %v104 = vld [vmem:[#allocation6 + $0xd8] sm:$0xff]
    %v105 = vld [vmem:[#allocation6 + $0xe0] sm:$0xff]
    %v106 = vld [vmem:[#allocation6 + $0xe8] sm:$0xff]
    %v107 = vld [vmem:[#allocation6 + $0xf0] sm:$0xff]
    %v108 = vld [vmem:[#allocation6 + $0xf8] sm:$0xff]
    %109 = vmatprep.subr.mxu0 0.0
    %110 = vmatpush1.xpose.msra.mxu0 %v77
    %111 = vmatprep.subr.mxu0 0.0
    %112 = vmatpush1.xpose.msra.mxu0 %v78
    %113 = vmatprep.subr.mxu0 0.0
    %114 = vmatpush1.xpose.msra.mxu0 %v79
    %115 = vmatprep.subr.mxu0 0.0
    %116 = vmatpush1.xpose.msra.mxu0 %v80
    %117 = vmatprep.subr.mxu0 0.0
    %118 = vmatpush1.xpose.msra.mxu0 %v81
    %119 = vmatprep.subr.mxu0 0.0
    %120 = vmatpush1.xpose.msra.mxu0 %v82
    %121 = vmatprep.subr.mxu0 0.0
    %122 = vmatpush1.xpose.msra.mxu0 %v83
    %123 = vmatprep.subr.mxu0 0.0
    %124 = vmatpush1.xpose.msra.mxu0 %v84
    %125 = vmatprep.subr.mxu0 0.0
    %126 = vmatpush1.xpose.msra.mxu0 %v85
    %127 = vmatprep.subr.mxu0 0.0
    %128 = vmatpush1.xpose.msra.mxu0 %v86
    %129 = vmatprep.subr.mxu0 0.0
    %130 = vmatpush1.xpose.msra.mxu0 %v87
    %131 = vmatprep.subr.mxu0 0.0
    %132 = vmatpush1.xpose.msra.mxu0 %v88
    %133 = vmatprep.subr.mxu0 0.0
    %134 = vmatpush1.xpose.msra.mxu0 %v89
    %135 = vmatprep.subr.mxu0 0.0
    %136 = vmatpush1.xpose.msra.mxu0 %v90
    %137 = vmatprep.subr.mxu0 0.0
    %138 = vmatpush1.xpose.msra.mxu0 %v91
    %139 = vmatprep.subr.mxu0 0.0
    %140 = vmatpush1.xpose.msra.mxu0 %v92
    %141 = vmatprep.subr.mxu0 0.0
    %142 = vmatpush1.xpose.msra.mxu0 %v93
    %143 = vmatprep.subr.mxu0 0.0
    %144 = vmatpush1.xpose.msra.mxu0 %v94
    %145 = vmatprep.subr.mxu0 0.0
    %146 = vmatpush1.xpose.msra.mxu0 %v95
    %147 = vmatprep.subr.mxu0 0.0
    %148 = vmatpush1.xpose.msra.mxu0 %v96
    %149 = vmatprep.subr.mxu0 0.0
    %150 = vmatpush1.xpose.msra.mxu0 %v97
    %151 = vmatprep.subr.mxu0 0.0
    %152 = vmatpush1.xpose.msra.mxu0 %v98
    %153 = vmatprep.subr.mxu0 0.0
    %154 = vmatpush1.xpose.msra.mxu0 %v99
    %155 = vmatprep.subr.mxu0 0.0
    %156 = vmatpush1.xpose.msra.mxu0 %v100
    %157 = vmatprep.subr.mxu0 0.0
    %158 = vmatpush1.xpose.msra.mxu0 %v101
    %159 = vmatprep.subr.mxu0 0.0
    %160 = vmatpush1.xpose.msra.mxu0 %v102
    %161 = vmatprep.subr.mxu0 0.0
    %162 = vmatpush1.xpose.msra.mxu0 %v103
    %163 = vmatprep.subr.mxu0 0.0
    %164 = vmatpush1.xpose.msra.mxu0 %v104
    %165 = vmatprep.subr.mxu0 0.0
    %166 = vmatpush1.xpose.msra.mxu0 %v105
    %167 = vmatprep.subr.mxu0 0.0
    %168 = vmatpush1.xpose.msra.mxu0 %v106
    %169 = vmatprep.subr.mxu0 0.0
    %170 = vmatpush1.xpose.msra.mxu0 %v107
    %171 = vmatprep.subr.mxu0 0.0
    %172 = vmatpush1.xpose.msra.mxu0 %v108
    %173 = vmatprep.mubr.f32.mxu0 0.0
    %174 = vmatmul.mubr.f32.gmra.mrb[0].mxu0 %v76
    %v175 = vpop.f32.mrb[0].mxu0
    %v176 = vadd.f32 0.0, %v175
    %v177 = vpop.f32.mrb[0].mxu0
    %v178 = vadd.f32 0.0, %v177
    %179 = vdwg.mxu0
    %v180 = vld [vmem:[#allocation8] sm:$0xff]
    %v181 = vld [vmem:[#allocation8 + $0x8] sm:$0xff]
    %v182 = vld [vmem:[#allocation8 + $0x10] sm:$0xff]
    %v183 = vld [vmem:[#allocation8 + $0x18] sm:$0xff]
    %v184 = vld [vmem:[#allocation8 + $0x20] sm:$0xff]
    %v185 = vld [vmem:[#allocation8 + $0x28] sm:$0xff]
    %v186 = vld [vmem:[#allocation8 + $0x30] sm:$0xff]
    %v187 = vld [vmem:[#allocation8 + $0x38] sm:$0xff]
    %v188 = vld [vmem:[#allocation8 + $0x40] sm:$0xff]
    %v189 = vld [vmem:[#allocation8 + $0x48] sm:$0xff]
    %v190 = vld [vmem:[#allocation8 + $0x50] sm:$0xff]
    %v191 = vld [vmem:[#allocation8 + $0x58] sm:$0xff]
    %v192 = vld [vmem:[#allocation8 + $0x60] sm:$0xff]
    %v193 = vld [vmem:[#allocation8 + $0x68] sm:$0xff]
    %v194 = vld [vmem:[#allocation8 + $0x70] sm:$0xff]
    %v195 = vld [vmem:[#allocation8 + $0x78] sm:$0xff]
    %v196 = vld [vmem:[#allocation8 + $0x80] sm:$0xff]
    %v197 = vld [vmem:[#allocation8 + $0x88] sm:$0xff]
    %v198 = vld [vmem:[#allocation8 + $0x90] sm:$0xff]
    %v199 = vld [vmem:[#allocation8 + $0x98] sm:$0xff]
    %v200 = vld [vmem:[#allocation8 + $0xa0] sm:$0xff]
    %v201 = vld [vmem:[#allocation8 + $0xa8] sm:$0xff]
    %v202 = vld [vmem:[#allocation8 + $0xb0] sm:$0xff]
    %v203 = vld [vmem:[#allocation8 + $0xb8] sm:$0xff]
    %v204 = vld [vmem:[#allocation8 + $0xc0] sm:$0xff]
    %v205 = vld [vmem:[#allocation8 + $0xc8] sm:$0xff]
    %v206 = vld [vmem:[#allocation8 + $0xd0] sm:$0xff]
    %v207 = vld [vmem:[#allocation8 + $0xd8] sm:$0xff]
    %v208 = vld [vmem:[#allocation8 + $0xe0] sm:$0xff]
    %v209 = vld [vmem:[#allocation8 + $0xe8] sm:$0xff]
    %v210 = vld [vmem:[#allocation8 + $0xf0] sm:$0xff]
    %v211 = vld [vmem:[#allocation8 + $0xf8] sm:$0xff]
    %212 = vmatprep.subr.mxu0 0.0
    %213 = vmatpush1.xpose.msra.mxu0 %v180
    %214 = vmatprep.subr.mxu0 0.0
    %215 = vmatpush1.xpose.msra.mxu0 %v181
    %216 = vmatprep.subr.mxu0 0.0
    %217 = vmatpush1.xpose.msra.mxu0 %v182
    %218 = vmatprep.subr.mxu0 0.0
    %219 = vmatpush1.xpose.msra.mxu0 %v183
    %220 = vmatprep.subr.mxu0 0.0
    %221 = vmatpush1.xpose.msra.mxu0 %v184
    %222 = vmatprep.subr.mxu0 0.0
    %223 = vmatpush1.xpose.msra.mxu0 %v185
    %224 = vmatprep.subr.mxu0 0.0
    %225 = vmatpush1.xpose.msra.mxu0 %v186
    %226 = vmatprep.subr.mxu0 0.0
    %227 = vmatpush1.xpose.msra.mxu0 %v187
    %228 = vmatprep.subr.mxu0 0.0
    %229 = vmatpush1.xpose.msra.mxu0 %v188
    %230 = vmatprep.subr.mxu0 0.0
    %231 = vmatpush1.xpose.msra.mxu0 %v189
    %232 = vmatprep.subr.mxu0 0.0
    %233 = vmatpush1.xpose.msra.mxu0 %v190
    %234 = vmatprep.subr.mxu0 0.0
    %235 = vmatpush1.xpose.msra.mxu0 %v191
    %236 = vmatprep.subr.mxu0 0.0
    %237 = vmatpush1.xpose.msra.mxu0 %v192
    %238 = vmatprep.subr.mxu0 0.0
    %239 = vmatpush1.xpose.msra.mxu0 %v193
    %240 = vmatprep.subr.mxu0 0.0
    %241 = vmatpush1.xpose.msra.mxu0 %v194
    %242 = vmatprep.subr.mxu0 0.0
    %243 = vmatpush1.xpose.msra.mxu0 %v195
    %244 = vmatprep.subr.mxu0 0.0
    %245 = vmatpush1.xpose.msra.mxu0 %v196
    %246 = vmatprep.subr.mxu0 0.0
    %247 = vmatpush1.xpose.msra.mxu0 %v197
    %248 = vmatprep.subr.mxu0 0.0
    %249 = vmatpush1.xpose.msra.mxu0 %v198
    %250 = vmatprep.subr.mxu0 0.0
    %251 = vmatpush1.xpose.msra.mxu0 %v199
    %252 = vmatprep.subr.mxu0 0.0
    %253 = vmatpush1.xpose.msra.mxu0 %v200
    %254 = vmatprep.subr.mxu0 0.0
    %255 = vmatpush1.xpose.msra.mxu0 %v201
    %256 = vmatprep.subr.mxu0 0.0
    %257 = vmatpush1.xpose.msra.mxu0 %v202
    %258 = vmatprep.subr.mxu0 0.0
    %259 = vmatpush1.xpose.msra.mxu0 %v203
    %260 = vmatprep.subr.mxu0 0.0
    %261 = vmatpush1.xpose.msra.mxu0 %v204
    %262 = vmatprep.subr.mxu0 0.0
    %263 = vmatpush1.xpose.msra.mxu0 %v205
    %264 = vmatprep.subr.mxu0 0.0
    %265 = vmatpush1.xpose.msra.mxu0 %v206
    %266 = vmatprep.subr.mxu0 0.0
    %267 = vmatpush1.xpose.msra.mxu0 %v207
    %268 = vmatprep.subr.mxu0 0.0
    %269 = vmatpush1.xpose.msra.mxu0 %v208
    %270 = vmatprep.subr.mxu0 0.0
    %271 = vmatpush1.xpose.msra.mxu0 %v209
    %272 = vmatprep.subr.mxu0 0.0
    %273 = vmatpush1.xpose.msra.mxu0 %v210
    %274 = vmatprep.subr.mxu0 0.0
    %275 = vmatpush1.xpose.msra.mxu0 %v211
    %276 = vmatprep.mubr.f32.mxu0 0.0
    %277 = vmatmul.mubr.f32.gmra.mrb[0].mxu0 %v76
    %v278 = vpop.f32.mrb[0].mxu0
    %v279 = vadd.f32 0.0, %v278
    %v280 = vpop.f32.mrb[0].mxu0
    %v281 = vadd.f32 0.0, %v280
    %282 = vdwg.mxu0
    %v283 = vxor.u32 %v176, 2147483648
    %v284 = vxor.u32 %v178, 2147483648
    %v285 = vmul.f32 %v283, 1.442695
    %v286 = vpow.pop %v285
    %v287 = vmul.f32 %v284, 1.442695
    %v288 = vpow.pop %v287
    %v289 = vadd.f32 %v286, 1.0
    %v290 = vadd.f32 %v288, 1.0
    %v291 = vrcp.pop %v289
    %v292 = vmul.f32 1.0, %v291
    %v293 = vrcp.pop %v290
    %v294 = vmul.f32 1.0, %v293
    %v295 = vmul.f32 %v176, %v292
    %v296 = vmul.f32 %v178, %v294
    %v297 = vmul.f32 %v295, %v279
    %v298 = vmul.f32 %v296, %v281
    %v299 = vld [vmem:[#allocation2] sm:$0xff]
    %v300 = vld [vmem:[#allocation9] sm:$0xff]
    %v301 = vld [vmem:[#allocation9 + $0x8] sm:$0xff]
    %v302 = vld [vmem:[#allocation9 + $0x10] sm:$0xff]
    %v303 = vld [vmem:[#allocation9 + $0x18] sm:$0xff]
    %v304 = vld [vmem:[#allocation9 + $0x20] sm:$0xff]
    %v305 = vld [vmem:[#allocation9 + $0x28] sm:$0xff]
    %v306 = vld [vmem:[#allocation9 + $0x30] sm:$0xff]
    %v307 = vld [vmem:[#allocation9 + $0x38] sm:$0xff]
    %v308 = vld [vmem:[#allocation9 + $0x40] sm:$0xff]
    %v309 = vld [vmem:[#allocation9 + $0x48] sm:$0xff]
    %v310 = vld [vmem:[#allocation9 + $0x50] sm:$0xff]
    %v311 = vld [vmem:[#allocation9 + $0x58] sm:$0xff]
    %v312 = vld [vmem:[#allocation9 + $0x60] sm:$0xff]
    %v313 = vld [vmem:[#allocation9 + $0x68] sm:$0xff]
    %v314 = vld [vmem:[#allocation9 + $0x70] sm:$0xff]
    %v315 = vld [vmem:[#allocation9 + $0x78] sm:$0xff]
    %v316 = vld [vmem:[#allocation9 + $0x80] sm:$0xff]
    %v317 = vld [vmem:[#allocation9 + $0x88] sm:$0xff]
    %v318 = vld [vmem:[#allocation9 + $0x90] sm:$0xff]
    %v319 = vld [vmem:[#allocation9 + $0x98] sm:$0xff]
    %v320 = vld [vmem:[#allocation9 + $0xa0] sm:$0xff]
    %v321 = vld [vmem:[#allocation9 + $0xa8] sm:$0xff]
    %v322 = vld [vmem:[#allocation9 + $0xb0] sm:$0xff]
    %v323 = vld [vmem:[#allocation9 + $0xb8] sm:$0xff]
    %v324 = vld [vmem:[#allocation9 + $0xc0] sm:$0xff]
    %v325 = vld [vmem:[#allocation9 + $0xc8] sm:$0xff]
    %v326 = vld [vmem:[#allocation9 + $0xd0] sm:$0xff]
    %v327 = vld [vmem:[#allocation9 + $0xd8] sm:$0xff]
    %v328 = vld [vmem:[#allocation9 + $0xe0] sm:$0xff]
    %v329 = vld [vmem:[#allocation9 + $0xe8] sm:$0xff]
    %v330 = vld [vmem:[#allocation9 + $0xf0] sm:$0xff]
    %v331 = vld [vmem:[#allocation9 + $0xf8] sm:$0xff]
    %332 = vmatprep.subr.mxu0 %v301
    %333 = vmatpush1.xpose.msra.mxu0 %v300
    %334 = vmatprep.subr.mxu0 %v303
    %335 = vmatpush1.xpose.msra.mxu0 %v302
    %336 = vmatprep.subr.mxu0 %v305
    %337 = vmatpush1.xpose.msra.mxu0 %v304
    %338 = vmatprep.subr.mxu0 %v307
    %339 = vmatpush1.xpose.msra.mxu0 %v306
    %340 = vmatprep.subr.mxu0 %v309
    %341 = vmatpush1.xpose.msra.mxu0 %v308
    %342 = vmatprep.subr.mxu0 %v311
    %343 = vmatpush1.xpose.msra.mxu0 %v310
    %344 = vmatprep.subr.mxu0 %v313
    %345 = vmatpush1.xpose.msra.mxu0 %v312
    %346 = vmatprep.subr.mxu0 %v315
    %347 = vmatpush1.xpose.msra.mxu0 %v314
    %348 = vmatprep.subr.mxu0 %v317
    %349 = vmatpush1.xpose.msra.mxu0 %v316
    %350 = vmatprep.subr.mxu0 %v319
    %351 = vmatpush1.xpose.msra.mxu0 %v318
    %352 = vmatprep.subr.mxu0 %v321
    %353 = vmatpush1.xpose.msra.mxu0 %v320
    %354 = vmatprep.subr.mxu0 %v323
    %355 = vmatpush1.xpose.msra.mxu0 %v322
    %356 = vmatprep.subr.mxu0 %v325
    %357 = vmatpush1.xpose.msra.mxu0 %v324
    %358 = vmatprep.subr.mxu0 %v327
    %359 = vmatpush1.xpose.msra.mxu0 %v326
    %360 = vmatprep.subr.mxu0 %v329
    %361 = vmatpush1.xpose.msra.mxu0 %v328
    %362 = vmatprep.subr.mxu0 %v331
    %363 = vmatpush1.xpose.msra.mxu0 %v330
    %364 = vmatprep.subr.mxu0 0.0
    %365 = vmatpush1.xpose.msra.mxu0 0.0
    %366 = vmatprep.subr.mxu0 0.0
    %367 = vmatpush1.xpose.msra.mxu0 0.0
    %368 = vmatprep.subr.mxu0 0.0
    %369 = vmatpush1.xpose.msra.mxu0 0.0
    %370 = vmatprep.subr.mxu0 0.0
    %371 = vmatpush1.xpose.msra.mxu0 0.0
    %372 = vmatprep.subr.mxu0 0.0
    %373 = vmatpush1.xpose.msra.mxu0 0.0
    %374 = vmatprep.subr.mxu0 0.0
    %375 = vmatpush1.xpose.msra.mxu0 0.0
    %376 = vmatprep.subr.mxu0 0.0
    %377 = vmatpush1.xpose.msra.mxu0 0.0
    %378 = vmatprep.subr.mxu0 0.0
    %379 = vmatpush1.xpose.msra.mxu0 0.0
    %380 = vmatprep.subr.mxu0 0.0
    %381 = vmatpush1.xpose.msra.mxu0 0.0
    %382 = vmatprep.subr.mxu0 0.0
    %383 = vmatpush1.xpose.msra.mxu0 0.0
    %384 = vmatprep.subr.mxu0 0.0
    %385 = vmatpush1.xpose.msra.mxu0 0.0
    %386 = vmatprep.subr.mxu0 0.0
    %387 = vmatpush1.xpose.msra.mxu0 0.0
    %388 = vmatprep.subr.mxu0 0.0
    %389 = vmatpush1.xpose.msra.mxu0 0.0
    %390 = vmatprep.subr.mxu0 0.0
    %391 = vmatpush1.xpose.msra.mxu0 0.0
    %392 = vmatprep.subr.mxu0 0.0
    %393 = vmatpush1.xpose.msra.mxu0 0.0
    %394 = vmatprep.subr.mxu0 0.0
    %395 = vmatpush1.xpose.msra.mxu0 0.0
    %396 = vmatprep.mubr.f32.mxu0 %v298
    %397 = vmatmul.mubr.f32.gmra.mrb[0].mxu0 %v297
    %v398 = vpop.f32.mrb[0].mxu0
    %v399 = vadd.f32 0.0, %v398
    %v400 = vpop.f32.mrb[0].mxu0
    %401 = vdwg.mxu0
    %v402 = vadd.f32 %v299, %v399
    %403 = vst [vmem:[#allocation2] sm:$0xff] %v402
    // Predicated region
    $region38: #{mixtral_block_sparse_top2_mlp.1} parent=1 // pred_check
      %p404 = pneg %p71
    $region39: #{mixtral_block_sparse_top2_mlp.1} parent=1 // pred_check_branch
      %406 = sbr.rel (%p404) target = $region41
    $region40: #{mixtral_block_sparse_top2_mlp.1} parent=1 // pred_region
      %v407 = vld [vmem:[#allocation2] sm:$0xff]
      %408 = vst [vmem:[#allocation11] sm:$0xff] %v407
    $region41: #{mixtral_block_sparse_top2_mlp.1} parent=1 // pred_fallthru
      _
    // Predicated region
    $region42: #{mixtral_block_sparse_top2_mlp.1} parent=1 // pred_check
      _
    $region43: #{mixtral_block_sparse_top2_mlp.1} parent=1 // pred_check_branch
      %410 = sbr.rel (0) target = $region45
    $region44: #{mixtral_block_sparse_top2_mlp.1} parent=1 // pred_region
      %s412 = ssub.s32 128, 128
      %413 = vsyncadd [#allocation5], %s412
      %s415 = sshll.u32 [#allocation11], 4
      %s416 = int_to_ptr.vmem [resolvable:$true] %s415
      %418 = dma.vmem_to_hbm [thread:$0]  %s416, 128, %s4, [#allocation5]
    $region45: #{mixtral_block_sparse_top2_mlp.1} parent=1 // pred_fallthru
      _
    // Predicated region
    $region46: #{mixtral_block_sparse_top2_mlp.1} parent=1 // pred_check
      _
    $region47: #{mixtral_block_sparse_top2_mlp.1} parent=1 // pred_check_branch
      %420 = sbr.rel (0) target = $region49
    $region48: #{mixtral_block_sparse_top2_mlp.1} parent=1 // pred_region
      %421 = dma.done [#allocation5], 128
    $region49: #{mixtral_block_sparse_top2_mlp.1} parent=1 // pred_fallthru
      _
    %422 = vsyncpa [#allocation4], 1
    %423 = vsyncpa [#allocation7], 1
    %424 = vsyncpa [#allocation10], 1
    %425 = vsyncpa [#allocation5], 1

</llo_original>
